<compile_context>
chip_gen: v5e
topology: v5e:2x2
jax: 0.10.0
libtpu: 0.0.40
codegen_flags: <defaults>
</compile_context>

<pallas_src>
import functools
import math

import jax
import jax.numpy as jnp
from jax.experimental import pallas as pl
from jax.experimental.pallas import tpu as pltpu


def _contrastive_loss_kernel(emb_i_ref, emb_j_ref, emb_k_ref, loss_ref, *,
                             temperature, batch_size):
    inv_t = 1.0 / float(temperature)
    eps = 1e-12  # torch F.normalize eps
    B = batch_size

    # --- one-shot L2 normalization of all three embedding sets (f32, EUP rsqrt) ---
    e_all = jnp.concatenate(
        [emb_i_ref[...], emb_j_ref[...], emb_k_ref[...]], axis=0
    ).astype(jnp.float32)                                               # (3B, D)
    ss = jnp.sum(e_all * e_all, axis=1, keepdims=True)                  # (3B, 1)
    # x * rsqrt(max(ss, eps^2)) == x / max(||x||, eps)  (F.normalize semantics)
    z_all = e_all * jax.lax.rsqrt(jnp.maximum(ss, eps * eps))           # (3B, D)
    z_i = z_all[:B]                                                     # (B, D)
    z_j = z_all[B:2 * B]                                                # (B, D)
    z_k = z_all[2 * B:]                                                 # (B, D)

    # --- three BxB similarity blocks (S_ji = S_ij^T is never materialized) ---
    # NT-form dot_general: contract the feature dim of both operands directly on
    # the MXU (no explicit transpose of the key operand).
    nt = (((1,), (1,)), ((), ()))
    s_ii = jax.lax.dot_general(z_i, z_i, nt, preferred_element_type=jnp.float32)
    s_ij = jax.lax.dot_general(z_i, z_j, nt, preferred_element_type=jnp.float32)
    s_jj = jax.lax.dot_general(z_j, z_j, nt, preferred_element_type=jnp.float32)

    # Shifted exponentials exp((s - 1)/T): arguments <= 0, robust for small T.
    e_ii = jnp.exp((s_ii - 1.0) * inv_t)                                # (B, B)
    e_ij = jnp.exp((s_ij - 1.0) * inv_t)                                # (B, B)
    e_jj = jnp.exp((s_jj - 1.0) * inv_t)                                # (B, B)

    row_ii = jnp.sum(e_ii, axis=1, keepdims=True)                       # (B, 1)
    row_ij = jnp.sum(e_ij, axis=1, keepdims=True)                       # (B, 1)
    row_jj = jnp.sum(e_jj, axis=1, keepdims=True)                       # (B, 1)
    # Bottom-half rows of the virtual (2B,2B) matrix need column sums of e_ij;
    # reorient the tiny (1,B) result to (B,1).
    col_ij = jnp.transpose(jnp.sum(e_ij, axis=0, keepdims=True))        # (B, 1)

    # positives: sim_ij = sim_ji = <z_i[m], z_j[m]>;  fu term: sim_ik = sim_ki.
    p = jnp.sum(z_i * z_j, axis=1, keepdims=True)                       # (B, 1)
    q = jnp.sum(z_k * z_i, axis=1, keepdims=True)                       # (B, 1)
    exp_q = jnp.exp((q - 1.0) * inv_t)                                  # (B, 1)

    # Masked row sums: diag(S_ii) = diag(S_jj) = ||z||^2 = 1 -> shifted diag = 1.0.
    den_top = row_ii - 1.0 + row_ij + exp_q                             # (B, 1)
    den_bot = row_jj - 1.0 + col_ij + exp_q                             # (B, 1)

    # -log(exp(p/T)/den) == log(den') - (p-1)/T in the shifted form;
    # each positive appears in both halves -> factor 2 on the p-term.
    loss = (jnp.sum(jnp.log(den_top) + jnp.log(den_bot))
            - 2.0 * inv_t * jnp.sum(p - 1.0)) / (2.0 * batch_size)

    loss_ref[0, 0] = loss


def contrastive_loss(emb_i, emb_j, emb_k, *, temperature=0.2):
    batch_size, dim = emb_i.shape
    assert emb_j.shape == (batch_size, dim) and emb_k.shape == (batch_size, dim)

    kernel = functools.partial(_contrastive_loss_kernel,
                               temperature=float(temperature),
                               batch_size=int(batch_size))

    # Three separate whole-array VMEM inputs (no host-side stack), SMEM scalar out.
    vmem_spec = pl.BlockSpec(memory_space=pltpu.VMEM)
    out = pl.pallas_call(
        kernel,
        out_shape=jax.ShapeDtypeStruct((1, 1), jnp.float32),
        in_specs=[vmem_spec, vmem_spec, vmem_spec],
        out_specs=pl.BlockSpec(memory_space=pltpu.SMEM),
    )(emb_i, emb_j, emb_k)
    return out[0, 0]


def _reference_loss(emb_i, emb_j, emb_k, temperature=0.2):
    """Pure-JAX reference mirroring the (reconstructed) PyTorch forward."""
    def l2norm(x):
        n = jnp.sqrt(jnp.sum(x * x, axis=1, keepdims=True))
        return x / jnp.maximum(n, 1e-12)
    B = emb_i.shape[0]
    z_i, z_j, z_k = l2norm(emb_i), l2norm(emb_j), l2norm(emb_k)
    reps = jnp.concatenate([z_i, z_j], axis=0)
    sim = reps @ reps.T
    sim_ij = jnp.diagonal(sim, offset=B)
    sim_ji = jnp.diagonal(sim, offset=-B)
    positives = jnp.concatenate([sim_ij, sim_ji], axis=0)
    nominator = jnp.exp(positives / temperature)
    reps_fu = jnp.concatenate([z_k, z_i], axis=0)
    sim_fu = reps_fu @ reps_fu.T
    fu = jnp.concatenate([jnp.diagonal(sim_fu, offset=B),
                          jnp.diagonal(sim_fu, offset=-B)], axis=0)
    denominator_fu = jnp.exp(fu / temperature)
    mask = (~jnp.eye(2 * B, dtype=bool)).astype(jnp.float32)
    denominator = jnp.sum(mask * jnp.exp(sim / temperature), axis=1)
    loss_partial = -jnp.log(nominator / (denominator + denominator_fu))
    return jnp.sum(loss_partial) / (2 * B)


if __name__ == "__main__":
    key = jax.random.PRNGKey(0)
    k1, k2, k3 = jax.random.split(key, 3)
    batch_size, dim = 8, 32
    emb_i = jax.random.normal(k1, (batch_size, dim), dtype=jnp.float32)
    emb_j = jax.random.normal(k2, (batch_size, dim), dtype=jnp.float32)
    emb_k = jax.random.normal(k3, (batch_size, dim), dtype=jnp.float32)

    loss = contrastive_loss(emb_i, emb_j, emb_k, temperature=0.2)
    loss = jax.block_until_ready(loss)

    ref = _reference_loss(emb_i, emb_j, emb_k, temperature=0.2)
    # rsqrt, the symmetric 3-block decomposition, the unit-diagonal constant and
    # the shifted exp reorder f32 ops slightly vs. the reference; the tolerance
    # covers that (expected |delta| ~1e-5) while still catching real errors.
    assert jnp.allclose(loss, ref, rtol=5e-4, atol=1e-4), (loss, ref)
    assert math.isfinite(float(loss))
    print("KERNEL_OK")
</pallas_src>

<mosaic_0001>
module attributes {stable_mosaic.version = 11 : i64} {
  func.func @_contrastive_loss_kernel(%arg0: memref<8x32xf32, #tpu.memory_space<vmem>>, %arg1: memref<8x32xf32, #tpu.memory_space<vmem>>, %arg2: memref<8x32xf32, #tpu.memory_space<vmem>>, %arg3: memref<1x1xf32, #tpu.memory_space<smem>>) attributes {dimension_semantics = [], scalar_prefetch = 0 : i64, scratch_operands = 0 : i64, tpu.core_type = #tpu.core_type<tc>} {
    %c0 = arith.constant 0 : index
    %c0_0 = arith.constant 0 : index
    %0 = vector.load %arg0[%c0, %c0_0] : memref<8x32xf32, #tpu.memory_space<vmem>>, vector<8x32xf32>
    %c0_1 = arith.constant 0 : index
    %c0_2 = arith.constant 0 : index
    %1 = vector.load %arg1[%c0_1, %c0_2] : memref<8x32xf32, #tpu.memory_space<vmem>>, vector<8x32xf32>
    %c0_3 = arith.constant 0 : index
    %c0_4 = arith.constant 0 : index
    %2 = vector.load %arg2[%c0_3, %c0_4] : memref<8x32xf32, #tpu.memory_space<vmem>>, vector<8x32xf32>
    %3 = tpu.concatenate %0, %1, %2 in 0 : vector<8x32xf32>, vector<8x32xf32>, vector<8x32xf32> -> vector<24x32xf32>
    %4 = arith.mulf %3, %3 : vector<24x32xf32>
    %cst = arith.constant dense<0.000000e+00> : vector<24xf32>
    %5 = vector.multi_reduction <add>, %4, %cst [1] : vector<24x32xf32> to vector<24xf32>
    %6 = vector.shape_cast %5 : vector<24xf32> to vector<24x1xf32>
    %cst_5 = arith.constant 1.000000e-24 : f32
    %7 = vector.broadcast %cst_5 : f32 to vector<24x1xf32>
    %8 = arith.maximumf %6, %7 : vector<24x1xf32>
    %9 = math.rsqrt %8 : vector<24x1xf32>
    %10 = vector.broadcast %9 : vector<24x1xf32> to vector<24x32xf32>
    %11 = arith.mulf %3, %10 : vector<24x32xf32>
    %12 = vector.extract_strided_slice %11 {offsets = [0, 0], sizes = [8, 32], strides = [1, 1]} : vector<24x32xf32> to vector<8x32xf32>
    %13 = vector.extract_strided_slice %11 {offsets = [8, 0], sizes = [8, 32], strides = [1, 1]} : vector<24x32xf32> to vector<8x32xf32>
    %14 = vector.extract_strided_slice %11 {offsets = [16, 0], sizes = [8, 32], strides = [1, 1]} : vector<24x32xf32> to vector<8x32xf32>
    %cst_6 = arith.constant dense<0.000000e+00> : vector<8x8xf32>
    %15 = tpu.matmul %12, %12, %cst_6 {dimension_numbers = #tpu.dot_dimension_numbers<[1], [1], [0], [0], [0, 0, 1, 0], [], []>} : vector<8x32xf32>, vector<8x32xf32>, vector<8x8xf32> -> vector<8x8xf32>
    %cst_7 = arith.constant dense<0.000000e+00> : vector<8x8xf32>
    %16 = tpu.matmul %12, %13, %cst_7 {dimension_numbers = #tpu.dot_dimension_numbers<[1], [1], [0], [0], [0, 0, 1, 0], [], []>} : vector<8x32xf32>, vector<8x32xf32>, vector<8x8xf32> -> vector<8x8xf32>
    %cst_8 = arith.constant dense<0.000000e+00> : vector<8x8xf32>
    %17 = tpu.matmul %13, %13, %cst_8 {dimension_numbers = #tpu.dot_dimension_numbers<[1], [1], [0], [0], [0, 0, 1, 0], [], []>} : vector<8x32xf32>, vector<8x32xf32>, vector<8x8xf32> -> vector<8x8xf32>
    %cst_9 = arith.constant 1.000000e+00 : f32
    %18 = vector.broadcast %cst_9 : f32 to vector<8x8xf32>
    %19 = arith.subf %15, %18 : vector<8x8xf32>
    %cst_10 = arith.constant 5.000000e+00 : f32
    %20 = vector.broadcast %cst_10 : f32 to vector<8x8xf32>
    %21 = arith.mulf %19, %20 : vector<8x8xf32>
    %22 = math.exp %21 : vector<8x8xf32>
    %cst_11 = arith.constant 1.000000e+00 : f32
    %23 = vector.broadcast %cst_11 : f32 to vector<8x8xf32>
    %24 = arith.subf %16, %23 : vector<8x8xf32>
    %cst_12 = arith.constant 5.000000e+00 : f32
    %25 = vector.broadcast %cst_12 : f32 to vector<8x8xf32>
    %26 = arith.mulf %24, %25 : vector<8x8xf32>
    %27 = math.exp %26 : vector<8x8xf32>
    %cst_13 = arith.constant 1.000000e+00 : f32
    %28 = vector.broadcast %cst_13 : f32 to vector<8x8xf32>
    %29 = arith.subf %17, %28 : vector<8x8xf32>
    %cst_14 = arith.constant 5.000000e+00 : f32
    %30 = vector.broadcast %cst_14 : f32 to vector<8x8xf32>
    %31 = arith.mulf %29, %30 : vector<8x8xf32>
    %32 = math.exp %31 : vector<8x8xf32>
    %cst_15 = arith.constant dense<0.000000e+00> : vector<8xf32>
    %33 = vector.multi_reduction <add>, %22, %cst_15 [1] : vector<8x8xf32> to vector<8xf32>
    %34 = vector.shape_cast %33 : vector<8xf32> to vector<8x1xf32>
    %cst_16 = arith.constant dense<0.000000e+00> : vector<8xf32>
    %35 = vector.multi_reduction <add>, %27, %cst_16 [1] : vector<8x8xf32> to vector<8xf32>
    %36 = vector.shape_cast %35 : vector<8xf32> to vector<8x1xf32>
    %cst_17 = arith.constant dense<0.000000e+00> : vector<8xf32>
    %37 = vector.multi_reduction <add>, %32, %cst_17 [1] : vector<8x8xf32> to vector<8xf32>
    %38 = vector.shape_cast %37 : vector<8xf32> to vector<8x1xf32>
    %cst_18 = arith.constant dense<0.000000e+00> : vector<8xf32>
    %39 = vector.multi_reduction <add>, %27, %cst_18 [0] : vector<8x8xf32> to vector<8xf32>
    %40 = vector.shape_cast %39 : vector<8xf32> to vector<1x8xf32>
    %41 = tpu.transpose %40, [1, 0] : vector<1x8xf32> -> vector<8x1xf32>
    %42 = arith.mulf %12, %13 : vector<8x32xf32>
    %cst_19 = arith.constant dense<0.000000e+00> : vector<8xf32>
    %43 = vector.multi_reduction <add>, %42, %cst_19 [1] : vector<8x32xf32> to vector<8xf32>
    %44 = vector.shape_cast %43 : vector<8xf32> to vector<8x1xf32>
    %45 = arith.mulf %14, %12 : vector<8x32xf32>
    %cst_20 = arith.constant dense<0.000000e+00> : vector<8xf32>
    %46 = vector.multi_reduction <add>, %45, %cst_20 [1] : vector<8x32xf32> to vector<8xf32>
    %47 = vector.shape_cast %46 : vector<8xf32> to vector<8x1xf32>
    %cst_21 = arith.constant 1.000000e+00 : f32
    %48 = vector.broadcast %cst_21 : f32 to vector<8x1xf32>
    %49 = arith.subf %47, %48 : vector<8x1xf32>
    %cst_22 = arith.constant 5.000000e+00 : f32
    %50 = vector.broadcast %cst_22 : f32 to vector<8x1xf32>
    %51 = arith.mulf %49, %50 : vector<8x1xf32>
    %52 = math.exp %51 : vector<8x1xf32>
    %cst_23 = arith.constant 1.000000e+00 : f32
    %53 = vector.broadcast %cst_23 : f32 to vector<8x1xf32>
    %54 = arith.subf %34, %53 : vector<8x1xf32>
    %55 = arith.addf %54, %36 : vector<8x1xf32>
    %56 = arith.addf %55, %52 : vector<8x1xf32>
    %cst_24 = arith.constant 1.000000e+00 : f32
    %57 = vector.broadcast %cst_24 : f32 to vector<8x1xf32>
    %58 = arith.subf %38, %57 : vector<8x1xf32>
    %59 = arith.addf %58, %41 : vector<8x1xf32>
    %60 = arith.addf %59, %52 : vector<8x1xf32>
    %61 = math.log %56 : vector<8x1xf32>
    %62 = math.log %60 : vector<8x1xf32>
    %63 = arith.addf %61, %62 : vector<8x1xf32>
    %64 = vector.shape_cast %63 : vector<8x1xf32> to vector<1x8x1xf32>
    %cst_25 = arith.constant dense<0.000000e+00> : vector<1xf32>
    %65 = vector.multi_reduction <add>, %64, %cst_25 [1, 2] : vector<1x8x1xf32> to vector<1xf32>
    %66 = vector.shape_cast %65 : vector<1xf32> to vector<1x1x1xf32>
    %67 = vector.extract %66[0, 0, 0] : f32 from vector<1x1x1xf32>
    %cst_26 = arith.constant 1.000000e+00 : f32
    %68 = vector.broadcast %cst_26 : f32 to vector<8x1xf32>
    %69 = arith.subf %44, %68 : vector<8x1xf32>
    %70 = vector.shape_cast %69 : vector<8x1xf32> to vector<1x8x1xf32>
    %cst_27 = arith.constant dense<0.000000e+00> : vector<1xf32>
    %71 = vector.multi_reduction <add>, %70, %cst_27 [1, 2] : vector<1x8x1xf32> to vector<1xf32>
    %72 = vector.shape_cast %71 : vector<1xf32> to vector<1x1x1xf32>
    %73 = vector.extract %72[0, 0, 0] : f32 from vector<1x1x1xf32>
    %cst_28 = arith.constant 1.000000e+01 : f32
    %74 = arith.mulf %cst_28, %73 : f32
    %75 = arith.subf %67, %74 : f32
    %cst_29 = arith.constant 1.600000e+01 : f32
    %76 = arith.divf %75, %cst_29 : f32
    %c0_30 = arith.constant 0 : index
    %c0_31 = arith.constant 0 : index
    %77 = memref.load %arg3[%c0_30, %c0_31] : memref<1x1xf32, #tpu.memory_space<smem>>
    memref.store %76, %arg3[%c0_30, %c0_31] : memref<1x1xf32, #tpu.memory_space<smem>>
    return
  }
}

</mosaic_0001>

<llo_original>
// kernel: tpu_custom_call.1
$region0: #{tpu_custom_call.1}
  #allocation0 [shape = 'u32[]', space=smem, size = 0x4, offset = 0x4, fixed_abs, tag = 'smem constant byte address 0x4 - core index']
  #allocation1 [shape = 'u32[72,128]{1,0:T(1,128)}', space=vmem, size = 0x9000, scoped, tag = 'internal scratch']
  %s0 = inlined_call_operand.hbm [shape: f32[8,32], index: 0, kind: input, shape index: {}]
  %s1 = inlined_call_operand.hbm [shape: f32[8,32], index: 1, kind: input, shape index: {}]
  %s2 = inlined_call_operand.hbm [shape: f32[8,32], index: 2, kind: input, shape index: {}]
  %s3 = inlined_call_operand.hbm [shape: f32[1,1], index: 3, kind: output, shape index: {}]
  %s4 = sld [smem:[#allocation0]]
  $region34: #{tpu_custom_call.1} parent=0
    _
  %s6 = ssub.s32 1, %s4
  %s7 = scalar_select 0, %s6, %s4
  $region1: #{tpu_custom_call.1} parent=0
    #allocation2 [shape = 'u8[4096]{0}', space=vmem, size = 0x1000, scoped, tag = 'input window, operand 0, single buffered']
    #allocation3 [shape = 's32[1]{0}', space=sflag, size = 0x4, scoped, tag = 'scoped memory for tpu_custom_call.1']
    #allocation4 [shape = 's32[1]{0}', space=sflag, size = 0x4, scoped, tag = 'scoped memory for tpu_custom_call.1']
    #allocation5 [shape = 'u8[4096]{0}', space=vmem, size = 0x1000, scoped, tag = 'input window, operand 1, single buffered']
    #allocation6 [shape = 's32[1]{0}', space=sflag, size = 0x4, scoped, tag = 'scoped memory for tpu_custom_call.1']
    #allocation7 [shape = 'u8[4096]{0}', space=vmem, size = 0x1000, scoped, tag = 'input window, operand 2, single buffered']
    #allocation8 [shape = 'u8[512]{0}', space=smem, size = 0x200, scoped, tag = 'output window, operand 0, single buffered']
    %8 = vsyncpa [#allocation3], 0
    %9 = vsyncpa [#allocation6], 0
    %10 = vsyncpa [#allocation4], 0
    // Predicated region
    $region2: #{tpu_custom_call.1} parent=1 // pred_check
      _
    $region3: #{tpu_custom_call.1} parent=1 // pred_check_branch
      %12 = sbr.rel (0) target = $region5
    $region4: #{tpu_custom_call.1} parent=1 // pred_region
      %14 = vsyncadd [#allocation3], 0
      %s16 = sshll.u32 %s0, 4
      %s17 = int_to_ptr.hbm [resolvable:$true] %s16
      %s18 = sshll.u32 [#allocation2], 4
      %s19 = int_to_ptr.vmem [resolvable:$true] %s18
      %21 = dma.hbm_to_vmem [thread:$0]  %s17, 128, %s19, [#allocation3]
    $region5: #{tpu_custom_call.1} parent=1 // pred_fallthru
      _
    // Predicated region
    $region6: #{tpu_custom_call.1} parent=1 // pred_check
      _
    $region7: #{tpu_custom_call.1} parent=1 // pred_check_branch
      %23 = sbr.rel (0) target = $region9
    $region8: #{tpu_custom_call.1} parent=1 // pred_region
      %25 = vsyncadd [#allocation6], 0
      %s27 = sshll.u32 %s1, 4
      %s28 = int_to_ptr.hbm [resolvable:$true] %s27
      %s29 = sshll.u32 [#allocation5], 4
      %s30 = int_to_ptr.vmem [resolvable:$true] %s29
      %32 = dma.hbm_to_vmem [thread:$0]  %s28, 128, %s30, [#allocation6]
    $region9: #{tpu_custom_call.1} parent=1 // pred_fallthru
      _
    // Predicated region
    $region10: #{tpu_custom_call.1} parent=1 // pred_check
      _
    $region11: #{tpu_custom_call.1} parent=1 // pred_check_branch
      %34 = sbr.rel (0) target = $region13
    $region12: #{tpu_custom_call.1} parent=1 // pred_region
      %36 = vsyncadd [#allocation6], 0
      %s38 = sshll.u32 %s2, 4
      %s39 = int_to_ptr.hbm [resolvable:$true] %s38
      %s40 = sshll.u32 [#allocation7], 4
      %s41 = int_to_ptr.vmem [resolvable:$true] %s40
      %43 = dma.hbm_to_vmem [thread:$0]  %s39, 128, %s41, [#allocation6]
    $region13: #{tpu_custom_call.1} parent=1 // pred_fallthru
      _
    // Predicated region
    $region14: #{tpu_custom_call.1} parent=1 // pred_check
      _
    $region15: #{tpu_custom_call.1} parent=1 // pred_check_branch
      %45 = sbr.rel (0) target = $region17
    $region16: #{tpu_custom_call.1} parent=1 // pred_region
      %47 = dma.done [#allocation3], 128
    $region17: #{tpu_custom_call.1} parent=1 // pred_fallthru
      _
    // Predicated region
    $region18: #{tpu_custom_call.1} parent=1 // pred_check
      _
    $region19: #{tpu_custom_call.1} parent=1 // pred_check_branch
      %49 = sbr.rel (0) target = $region21
    $region20: #{tpu_custom_call.1} parent=1 // pred_region
      %51 = dma.done [#allocation6], 128
    $region21: #{tpu_custom_call.1} parent=1 // pred_fallthru
      _
    // Predicated region
    $region22: #{tpu_custom_call.1} parent=1 // pred_check
      _
    $region23: #{tpu_custom_call.1} parent=1 // pred_check_branch
      %53 = sbr.rel (0) target = $region25
    $region24: #{tpu_custom_call.1} parent=1 // pred_region
      %55 = dma.done [#allocation6], 128
    $region25: #{tpu_custom_call.1} parent=1 // pred_fallthru
      _
    %v56 = vld [vmem:[#allocation2] sm:$0xff]
    %v57 = vld [vmem:[#allocation5] sm:$0xff]
    %v58 = vld [vmem:[#allocation7] sm:$0xff]
    %v59 = vmul.f32 %v56, %v56
    %v60 = vmul.f32 %v57, %v57
    %v61 = vmul.f32 %v58, %v58
    %vm62 = vcmask 261120
    %v63 = vsel %vm62, %v59, 0.0
    %64 = vadd.xlane.f32.xlu0 %v63
    %v65 = vpop.xlane.xlu0 %64
    %v66 = vsel %vm62, %v60, 0.0
    %67 = vadd.xlane.f32.xlu0 %v66
    %v68 = vpop.xlane.xlu0 %67
    %v69 = vsel %vm62, %v61, 0.0
    %70 = vadd.xlane.f32.xlu0 %v69
    %v71 = vpop.xlane.xlu0 %70
    %v72 = vmax.f32 %v65, 1e-24
    %v73 = vmax.f32 %v68, 1e-24
    %v74 = vmax.f32 %v71, 1e-24
    %v75 = vrsqrt.pop %v72
    %v76 = vmul.f32 %v75, %v72
    %v77 = vmul.f32 %v76, %v75
    %v78 = vmul.f32 0.5, %v77
    %v79 = vsub.f32 1.5, %v78
    %v80 = vmul.f32 %v75, %v79
    %vm81 = vweird.f32 %v72
    %vm82 = vweird.f32 %v75
    %vm83 = vmor %vm81, %vm82
    %v84 = vsel %vm83, %v75, %v80
    %v85 = vrsqrt.pop %v73
    %v86 = vmul.f32 %v85, %v73
    %v87 = vmul.f32 %v86, %v85
    %v88 = vmul.f32 0.5, %v87
    %v89 = vsub.f32 1.5, %v88
    %v90 = vmul.f32 %v85, %v89
    %vm91 = vweird.f32 %v73
    %vm92 = vweird.f32 %v85
    %vm93 = vmor %vm91, %vm92
    %v94 = vsel %vm93, %v85, %v90
    %v95 = vrsqrt.pop %v74
    %v96 = vmul.f32 %v95, %v74
    %v97 = vmul.f32 %v96, %v95
    %v98 = vmul.f32 0.5, %v97
    %v99 = vsub.f32 1.5, %v98
    %v100 = vmul.f32 %v95, %v99
    %vm101 = vweird.f32 %v74
    %vm102 = vweird.f32 %v95
    %vm103 = vmor %vm101, %vm102
    %v104 = vsel %vm103, %v95, %v100
    %v105 = vmul.f32 %v56, %v84
    %v106 = vmul.f32 %v57, %v94
    %v107 = vmul.f32 %v58, %v104
    %v109 = vsel %vm62, %v105, 0
    %111 = vmatpush.xpose.msra.mxu0 0.0
    %112 = vmatpush.xpose.msra.mxu0 0.0
    %113 = vmatpush.xpose.msra.mxu0 0.0
    %114 = vmatpush.xpose.msra.mxu0 0.0
    %115 = vmatpush.xpose.msra.mxu0 0.0
    %116 = vmatpush.xpose.msra.mxu0 0.0
    %117 = vmatpush.xpose.msra.mxu0 0.0
    %118 = vmatpush.xpose.msra.mxu0 0.0
    %119 = vmatpush.xpose.msra.mxu0 0.0
    %120 = vmatpush.xpose.msra.mxu0 0.0
    %121 = vmatpush.xpose.msra.mxu0 0.0
    %122 = vmatpush.xpose.msra.mxu0 0.0
    %123 = vmatpush.xpose.msra.mxu0 0.0
    %124 = vmatpush.xpose.msra.mxu0 0.0
    %125 = vmatpush.xpose.msra.mxu0 0.0
    %126 = vmatpush.xpose.msra.mxu0 %v109
    %127 = vmatmul.f32.gmra.mxu0 %v109
    %v128 = vpop.f32.mrf.mxu0
    %v129 = vadd.f32 0.0, %v128
    %130 = vdwg.mxu0
    %v132 = vsel %vm62, %v106, 0
    %134 = vmatpush.xpose.msra.mxu0 0.0
    %135 = vmatpush.xpose.msra.mxu0 0.0
    %136 = vmatpush.xpose.msra.mxu0 0.0
    %137 = vmatpush.xpose.msra.mxu0 0.0
    %138 = vmatpush.xpose.msra.mxu0 0.0
    %139 = vmatpush.xpose.msra.mxu0 0.0
    %140 = vmatpush.xpose.msra.mxu0 0.0
    %141 = vmatpush.xpose.msra.mxu0 0.0
    %142 = vmatpush.xpose.msra.mxu0 0.0
    %143 = vmatpush.xpose.msra.mxu0 0.0
    %144 = vmatpush.xpose.msra.mxu0 0.0
    %145 = vmatpush.xpose.msra.mxu0 0.0
    %146 = vmatpush.xpose.msra.mxu0 0.0
    %147 = vmatpush.xpose.msra.mxu0 0.0
    %148 = vmatpush.xpose.msra.mxu0 0.0
    %149 = vmatpush.xpose.msra.mxu0 %v132
    %150 = vmatmul.f32.gmra.mxu0 %v109
    %v151 = vpop.f32.mrf.mxu0
    %v152 = vadd.f32 0.0, %v151
    %153 = vdwg.mxu0
    %154 = vmatpush.xpose.msra.mxu0 0.0
    %155 = vmatpush.xpose.msra.mxu0 0.0
    %156 = vmatpush.xpose.msra.mxu0 0.0
    %157 = vmatpush.xpose.msra.mxu0 0.0
    %158 = vmatpush.xpose.msra.mxu0 0.0
    %159 = vmatpush.xpose.msra.mxu0 0.0
    %160 = vmatpush.xpose.msra.mxu0 0.0
    %161 = vmatpush.xpose.msra.mxu0 0.0
    %162 = vmatpush.xpose.msra.mxu0 0.0
    %163 = vmatpush.xpose.msra.mxu0 0.0
    %164 = vmatpush.xpose.msra.mxu0 0.0
    %165 = vmatpush.xpose.msra.mxu0 0.0
    %166 = vmatpush.xpose.msra.mxu0 0.0
    %167 = vmatpush.xpose.msra.mxu0 0.0
    %168 = vmatpush.xpose.msra.mxu0 0.0
    %169 = vmatpush.xpose.msra.mxu0 %v132
    %170 = vmatmul.f32.gmra.mxu0 %v132
    %v171 = vpop.f32.mrf.mxu0
    %v172 = vadd.f32 0.0, %v171
    %173 = vdwg.mxu0
    %v174 = vsub.f32 %v129, 1.0
    %v175 = vmul.f32 %v174, 5.0
    %v176 = vmul.f32 %v175, 1.442695
    %v177 = vpow.pop %v176
    %v178 = vsub.f32 %v152, 1.0
    %v179 = vmul.f32 %v178, 5.0
    %v180 = vmul.f32 %v179, 1.442695
    %v181 = vpow.pop %v180
    %v182 = vsub.f32 %v172, 1.0
    %v183 = vmul.f32 %v182, 5.0
    %v184 = vmul.f32 %v183, 1.442695
    %v185 = vpow.pop %v184
    %vm186 = vcmask 64512
    %v187 = vsel %vm186, %v177, 0.0
    %188 = vadd.xlane.f32.xlu0 %v187
    %v189 = vpop.xlane.xlu0 %188
    %v190 = vsel %vm186, %v181, 0.0
    %191 = vadd.xlane.f32.xlu0 %v190
    %v192 = vpop.xlane.xlu0 %191
    %v193 = vsel %vm186, %v185, 0.0
    %194 = vadd.xlane.f32.xlu0 %v193
    %v195 = vpop.xlane.xlu0 %194
    %v196 = vrot.slane %v190, 4
    %v197 = vadd.f32 %v190, %v196
    %v198 = vrot.slane %v197, 2
    %v199 = vadd.f32 %v197, %v198
    %v200 = vrot.slane %v199, 1
    %v201 = vadd.f32 %v199, %v200
    %202 = vxpose.xlu0.b32.start [1/16] %v201, 128
    %203 = vxpose.xlu0.b32.cont [2/16] 0.0, 128
    %204 = vxpose.xlu0.b32.cont [3/16] 0.0, 128
    %205 = vxpose.xlu0.b32.cont [4/16] 0.0, 128
    %206 = vxpose.xlu0.b32.cont [5/16] 0.0, 128
    %207 = vxpose.xlu0.b32.cont [6/16] 0.0, 128
    %208 = vxpose.xlu0.b32.cont [7/16] 0.0, 128
    %209 = vxpose.xlu0.b32.cont [8/16] 0.0, 128
    %210 = vxpose.xlu0.b32.cont [9/16] 0.0, 128
    %211 = vxpose.xlu0.b32.cont [10/16] 0.0, 128
    %212 = vxpose.xlu0.b32.cont [11/16] 0.0, 128
    %213 = vxpose.xlu0.b32.cont [12/16] 0.0, 128
    %214 = vxpose.xlu0.b32.cont [13/16] 0.0, 128
    %215 = vxpose.xlu0.b32.cont [14/16] 0.0, 128
    %216 = vxpose.xlu0.b32.cont [15/16] 0.0, 128
    %217 = vxpose.xlu0.b32.end [16/16] 0.0, 128
    %v218 = vpop.trf.xlu0
    %v219 = vpop.trf.xlu0
    %v220 = vpop.trf.xlu0
    %v221 = vpop.trf.xlu0
    %v222 = vpop.trf.xlu0
    %v223 = vpop.trf.xlu0
    %v224 = vpop.trf.xlu0
    %v225 = vpop.trf.xlu0
    %v226 = vpop.trf.xlu0
    %v227 = vpop.trf.xlu0
    %v228 = vpop.trf.xlu0
    %v229 = vpop.trf.xlu0
    %v230 = vpop.trf.xlu0
    %v231 = vpop.trf.xlu0
    %v232 = vpop.trf.xlu0
    %v233 = vpop.trf.xlu0
    %v234 = vmul.f32 %v105, %v106
    %v235 = vsel %vm62, %v234, 0.0
    %236 = vadd.xlane.f32.xlu0 %v235
    %v237 = vpop.xlane.xlu0 %236
    %v238 = vmul.f32 %v107, %v105
    %v239 = vsel %vm62, %v238, 0.0
    %240 = vadd.xlane.f32.xlu0 %v239
    %v241 = vpop.xlane.xlu0 %240
    %v242 = vsub.f32 %v241, 1.0
    %v243 = vmul.f32 %v242, 5.0
    %v244 = vmul.f32 %v243, 1.442695
    %v245 = vpow.pop %v244
    %v246 = vsub.f32 %v189, 1.0
    %v247 = vadd.f32 %v246, %v192
    %v248 = vadd.f32 %v247, %v245
    %v249 = vsub.f32 %v195, 1.0
    %v250 = vadd.f32 %v249, %v218
    %v251 = vadd.f32 %v250, %v245
    %v252 = vlog2.pop %v248
    %v253 = vmul.f32 %v252, 0.6931472
    %v254 = vlog2.pop %v251
    %v255 = vmul.f32 %v254, 0.6931472
    %v256 = vadd.f32 %v253, %v255
    %vm257 = vcmask 7168
    %v258 = vsel %vm257, %v256, 0.0
    %259 = vadd.xlane.f32.xlu0 %v258
    %v260 = vpop.xlane.xlu0 %259
    %v261 = vrot.slane %v260, 4
    %v262 = vadd.f32 %v260, %v261
    %v263 = vrot.slane %v262, 2
    %v264 = vadd.f32 %v262, %v263
    %v265 = vrot.slane %v264, 1
    %v266 = vadd.f32 %v264, %v265
    %s267 = vtos %v266
    %v268 = vsub.f32 %v237, 1.0
    %v269 = vsel %vm257, %v268, 0.0
    %270 = vadd.xlane.f32.xlu0 %v269
    %v271 = vpop.xlane.xlu0 %270
    %v272 = vrot.slane %v271, 4
    %v273 = vadd.f32 %v271, %v272
    %v274 = vrot.slane %v273, 2
    %v275 = vadd.f32 %v273, %v274
    %v276 = vrot.slane %v275, 1
    %v277 = vadd.f32 %v275, %v276
    %s278 = vtos %v277
    %s279 = smul.f32 %s278, 10.0
    %s280 = ssub.f32 %s267, %s279
    %v281 = vrcp.pop 16.0
    %v282 = vmul.f32 16.0, %v281
    %v283 = vsub.f32 1.0, %v282
    %v284 = vmul.f32 %v281, %v283
    %v285 = vadd.f32 %v281, %v284
    %vm286 = vweird.f32 %v281
    %v287 = vsel %vm286, %v281, %v285
    %s288 = vtos %v287
    %s289 = smul.f32 %s280, %s288
    %s290 = scalar_lea.smem [#allocation8], 0
    %291 = sst [smem:[%s290]] %s289
    // Predicated region
    $region26: #{tpu_custom_call.1} parent=1 // pred_check
      _
    $region27: #{tpu_custom_call.1} parent=1 // pred_check_branch
      %293 = sbr.rel (0) target = $region29
    $region28: #{tpu_custom_call.1} parent=1 // pred_region
      %295 = vsyncadd [#allocation4], 0
      %s297 = sshll.u32 %s3, 4
      %s298 = int_to_ptr.hbm [resolvable:$true] %s297
      %300 = dma.smem_to_hbm [#allocation8], 16, %s298, [#allocation4]
    $region29: #{tpu_custom_call.1} parent=1 // pred_fallthru
      _
    // Predicated region
    $region30: #{tpu_custom_call.1} parent=1 // pred_check
      _
    $region31: #{tpu_custom_call.1} parent=1 // pred_check_branch
      %302 = sbr.rel (0) target = $region33
    $region32: #{tpu_custom_call.1} parent=1 // pred_region
      %304 = dma.done [#allocation4], 16
    $region33: #{tpu_custom_call.1} parent=1 // pred_fallthru
      _
    %305 = sfence
    %306 = vsyncpa [#allocation3], 1
    %307 = vsyncpa [#allocation6], 1
    %308 = vsyncpa [#allocation4], 1

</llo_original>
